<compile_context>
chip_gen: v7x
topology: tpu7x:2x2x1
jax: 0.10.0
libtpu: 0.0.40
codegen_flags: <defaults>
</compile_context>

<pallas_src>
import functools

import jax
import jax.numpy as jnp
from jax.experimental import pallas as pl
from jax.experimental.pallas import tpu as pltpu


def _round_up(n, m):
    return ((n + m - 1) // m) * m


def _bezier_kernel(
    x0_ref, x2_ref, t_ref,
    w1a_ref, w1b_ref, b1_ref,
    w2_ref, b2_ref,
    w3_ref, b3_ref,
    w4_ref, b4_ref,
    bez_ref, dt_ref,
):
    x0 = x0_ref[...]                  # (TB, S) f32
    x2 = x2_ref[...]                  # (TB, S) f32
    t = t_ref[...]                    # (TB, 1) f32, broadcasts over lanes

    # --- MLP (f32 matmuls on the MXU, f32 accumulation) -----------------------
    # Layer 1 over the virtual concat: [x0 | x2] @ W1 == x0 @ W1a + x2 @ W1b.
    h = (jnp.dot(x0, w1a_ref[...], preferred_element_type=jnp.float32)
         + jnp.dot(x2, w1b_ref[...], preferred_element_type=jnp.float32)
         + b1_ref[...])
    h = jnp.maximum(h, 0.0)

    h = jnp.dot(h, w2_ref[...], preferred_element_type=jnp.float32) + b2_ref[...]
    h = jnp.maximum(h, 0.0)

    h = jnp.dot(h, w3_ref[...], preferred_element_type=jnp.float32) + b3_ref[...]
    h = jnp.maximum(h, 0.0)

    x1 = jnp.dot(h, w4_ref[...], preferred_element_type=jnp.float32) + b4_ref[...]

    # --- Bezier epilogue (f32), shared temporaries, two direct stores ---------
    one_m_t = 1.0 - t
    d01 = x0 - x1                     # x0 - x1
    d21 = x2 - x1                     # x2 - x1

    bez_ref[...] = x1 + (one_m_t * one_m_t) * d01 + (t * t) * d21
    # 2*(1-t)*(x1-x0) + 2*t*(x2-x1) == 2*(t*d21 - (1-t)*d01)
    dt_ref[...] = 2.0 * (t * d21 - one_m_t * d01)


_PARAM_ORDER = ("w1a", "w1b", "b1", "w2", "b2", "w3", "b3", "w4", "b4")
_VMEM_LIMIT = 32 * 1024 * 1024        # scoped VMEM request (safe on v5e/v6e/v7x)
_VMEM_BUDGET = 24 * 1024 * 1024       # activation working-set budget (headroom kept)


@functools.partial(jax.jit, static_argnames=("tb",))
def bezier_interpolant2(x0, x2, t, params, *, tb=2048):
    """params: dict with w1a/w1b (S,H), w2/w3 (H,H), w4 (H,S), b* (1,·), all f32."""
    B, S = x0.shape

    # --- choose the batch tile -------------------------------------------------
    tb = max(8, _round_up(tb, 8))                      # (8,128) sublane rule
    # Clamp so the double-buffered activation streams (x0, x2, t, bez, dt_bez;
    # all lane-padded to a multiple of 128) stay inside the VMEM budget.
    lane = 128 * pl.cdiv(S, 128)
    bytes_per_row = 2 * (4 * lane + 128) * 4           # 2 buffers * 5 streams * f32
    tb_cap = max(8, (_VMEM_BUDGET // bytes_per_row) // 8 * 8)
    tb = min(tb, tb_cap)
    # Prefer >= 2 grid steps so both TensorCores are used on v7x.
    n_steps = max(2, pl.cdiv(B, tb))
    tb = min(tb, _round_up(pl.cdiv(B, n_steps), 8))
    n_steps = pl.cdiv(B, tb)
    Bp = n_steps * tb

    x0f = x0.astype(jnp.float32)
    x2f = x2.astype(jnp.float32)
    tf = t.astype(jnp.float32)
    if Bp != B:                                        # only when batch not tile-aligned
        pad = ((0, Bp - B), (0, 0))
        x0f = jnp.pad(x0f, pad)
        x2f = jnp.pad(x2f, pad)
        tf = jnp.pad(tf, pad)

    def batch_spec(cols):
        return pl.BlockSpec((tb, cols), lambda i: (i, 0))

    def resident_spec(arr):
        # Same block index every grid step -> parameter stays resident in VMEM.
        return pl.BlockSpec(arr.shape, lambda i: (0, 0))

    param_list = [params[k] for k in _PARAM_ORDER]

    bez, dt_bez = pl.pallas_call(
        _bezier_kernel,
        grid=(n_steps,),
        out_shape=(jax.ShapeDtypeStruct((Bp, S), jnp.float32),
                   jax.ShapeDtypeStruct((Bp, S), jnp.float32)),
        in_specs=[batch_spec(S), batch_spec(S), batch_spec(1)]
        + [resident_spec(p) for p in param_list],
        out_specs=(batch_spec(S), batch_spec(S)),
        compiler_params=pltpu.CompilerParams(
            dimension_semantics=("parallel",),
            vmem_limit_bytes=_VMEM_LIMIT,
        ),
    )(x0f, x2f, tf, *param_list)

    if Bp != B:
        bez = bez[:B]
        dt_bez = dt_bez[:B]
    return bez, dt_bez


def init_params(key, state_dim, hid_dim=64):
    """Deterministic synthetic init, all float32 (faithful to the f32 PyTorch module).

    The PyTorch Linear(2*state_dim, hid_dim) weight is stored pre-split along its
    input dimension as w1a (rows for x0) and w1b (rows for x2); mathematically
    [x0|x2] @ W1 == x0 @ w1a + x2 @ w1b. Weights are (in, out); biases are (1, out).
    """
    ks = jax.random.split(key, 8)
    scale = 0.1

    def w(k, shape):
        return scale * jax.random.normal(k, shape, jnp.float32)

    def b(k, n):
        return scale * jax.random.normal(k, (1, n), jnp.float32)

    w1 = w(ks[0], (2 * state_dim, hid_dim))
    return {
        "w1a": w1[:state_dim],
        "w1b": w1[state_dim:],
        "b1": b(ks[1], hid_dim),
        "w2": w(ks[2], (hid_dim, hid_dim)),
        "b2": b(ks[3], hid_dim),
        "w3": w(ks[4], (hid_dim, hid_dim)),
        "b3": b(ks[5], hid_dim),
        "w4": w(ks[6], (hid_dim, state_dim)),
        "b4": b(ks[7], state_dim),
    }


def _reference(x0, x2, t, p):
    """Pure-JAX f32 reference matching the PyTorch forward."""
    w1 = jnp.concatenate([p["w1a"], p["w1b"]], axis=0)
    z = jnp.concatenate([x0, x2], axis=1)
    h = jnp.maximum(jnp.dot(z, w1, preferred_element_type=jnp.float32) + p["b1"], 0.0)
    h = jnp.maximum(jnp.dot(h, p["w2"], preferred_element_type=jnp.float32) + p["b2"], 0.0)
    h = jnp.maximum(jnp.dot(h, p["w3"], preferred_element_type=jnp.float32) + p["b3"], 0.0)
    x1 = jnp.dot(h, p["w4"], preferred_element_type=jnp.float32) + p["b4"]
    bez = x1 + (1 - t) ** 2 * (x0 - x1) + t ** 2 * (x2 - x1)
    dt_bez = 2 * (1 - t) * (x1 - x0) + 2 * t * (x2 - x1)
    return bez, dt_bez


if __name__ == "__main__":
    state_dim = 16
    hid_dim = 64

    key = jax.random.PRNGKey(0)
    k_x0, k_x2, k_t, k_p = jax.random.split(key, 4)
    params = init_params(k_p, state_dim, hid_dim)

    # Case 1: small batch, single grid step, no padding path.
    batch = 8
    x0 = jax.random.normal(k_x0, (batch, state_dim), jnp.float32)
    x2 = jax.random.normal(k_x2, (batch, state_dim), jnp.float32)
    t = jax.random.uniform(k_t, (batch, 1), jnp.float32)

    bez, dt_bez = bezier_interpolant2(x0, x2, t, params)
    jax.block_until_ready((bez, dt_bez))
    bez_ref, dt_ref = _reference(x0, x2, t, params)
    assert jnp.allclose(bez, bez_ref, atol=1e-2, rtol=1e-2)
    assert jnp.allclose(dt_bez, dt_ref, atol=1e-2, rtol=1e-2)

    # Case 2: batch not a multiple of the tile -> exercises multi-step grid + padding.
    batch2 = 40
    x0b = jax.random.normal(k_x2, (batch2, state_dim), jnp.float32)
    x2b = jax.random.normal(k_x0, (batch2, state_dim), jnp.float32)
    tb_ = jax.random.uniform(k_t, (batch2, 1), jnp.float32)

    bez2, dt2 = bezier_interpolant2(x0b, x2b, tb_, params, tb=16)
    jax.block_until_ready((bez2, dt2))
    bez2_ref, dt2_ref = _reference(x0b, x2b, tb_, params)
    assert jnp.allclose(bez2, bez2_ref, atol=1e-2, rtol=1e-2)
    assert jnp.allclose(dt2, dt2_ref, atol=1e-2, rtol=1e-2)

    print("KERNEL_OK")
</pallas_src>

<mosaic_0001>
module attributes {stable_mosaic.version = 11 : i64} {
  func.func @_bezier_kernel(%arg0: i32, %arg1: memref<8x16xf32, #tpu.memory_space<vmem>>, %arg2: memref<8x16xf32, #tpu.memory_space<vmem>>, %arg3: memref<8x1xf32, #tpu.memory_space<vmem>>, %arg4: memref<16x64xf32, #tpu.memory_space<vmem>>, %arg5: memref<16x64xf32, #tpu.memory_space<vmem>>, %arg6: memref<1x64xf32, #tpu.memory_space<vmem>>, %arg7: memref<64x64xf32, #tpu.memory_space<vmem>>, %arg8: memref<1x64xf32, #tpu.memory_space<vmem>>, %arg9: memref<64x64xf32, #tpu.memory_space<vmem>>, %arg10: memref<1x64xf32, #tpu.memory_space<vmem>>, %arg11: memref<64x16xf32, #tpu.memory_space<vmem>>, %arg12: memref<1x16xf32, #tpu.memory_space<vmem>>, %arg13: memref<8x16xf32, #tpu.memory_space<vmem>>, %arg14: memref<8x16xf32, #tpu.memory_space<vmem>>) attributes {dimension_semantics = [#tpu.dimension_semantics<parallel>], iteration_bounds = array<i64: 1>, scalar_prefetch = 0 : i64, scratch_operands = 0 : i64, tpu.core_type = #tpu.core_type<tc>, window_params = [{transform_indices = @transform_0, window_bounds = array<i64: 8, 16>}, {transform_indices = @transform_1, window_bounds = array<i64: 8, 16>}, {transform_indices = @transform_2, window_bounds = array<i64: 8, 1>}, {pipeline_mode = #tpu.pipeline_mode<synchronous>, transform_indices = @transform_3, window_bounds = array<i64: 16, 64>}, {pipeline_mode = #tpu.pipeline_mode<synchronous>, transform_indices = @transform_4, window_bounds = array<i64: 16, 64>}, {pipeline_mode = #tpu.pipeline_mode<synchronous>, transform_indices = @transform_5, window_bounds = array<i64: 1, 64>}, {pipeline_mode = #tpu.pipeline_mode<synchronous>, transform_indices = @transform_6, window_bounds = array<i64: 64, 64>}, {pipeline_mode = #tpu.pipeline_mode<synchronous>, transform_indices = @transform_7, window_bounds = array<i64: 1, 64>}, {pipeline_mode = #tpu.pipeline_mode<synchronous>, transform_indices = @transform_8, window_bounds = array<i64: 64, 64>}, {pipeline_mode = #tpu.pipeline_mode<synchronous>, transform_indices = @transform_9, window_bounds = array<i64: 1, 64>}, {pipeline_mode = #tpu.pipeline_mode<synchronous>, transform_indices = @transform_10, window_bounds = array<i64: 64, 16>}, {pipeline_mode = #tpu.pipeline_mode<synchronous>, transform_indices = @transform_11, window_bounds = array<i64: 1, 16>}, {transform_indices = @transform_12, window_bounds = array<i64: 8, 16>}, {transform_indices = @transform_13, window_bounds = array<i64: 8, 16>}]} {
    %c0 = arith.constant 0 : index
    %c0_0 = arith.constant 0 : index
    %0 = vector.load %arg1[%c0, %c0_0] : memref<8x16xf32, #tpu.memory_space<vmem>>, vector<8x16xf32>
    %c0_1 = arith.constant 0 : index
    %c0_2 = arith.constant 0 : index
    %1 = vector.load %arg2[%c0_1, %c0_2] : memref<8x16xf32, #tpu.memory_space<vmem>>, vector<8x16xf32>
    %c0_3 = arith.constant 0 : index
    %c0_4 = arith.constant 0 : index
    %2 = vector.load %arg3[%c0_3, %c0_4] : memref<8x1xf32, #tpu.memory_space<vmem>>, vector<8x1xf32>
    %c0_5 = arith.constant 0 : index
    %c0_6 = arith.constant 0 : index
    %3 = vector.load %arg4[%c0_5, %c0_6] : memref<16x64xf32, #tpu.memory_space<vmem>>, vector<16x64xf32>
    %cst = arith.constant dense<0.000000e+00> : vector<8x64xf32>
    %4 = tpu.matmul %0, %3, %cst {dimension_numbers = #tpu.dot_dimension_numbers<[1], [0], [0], [1], [0, 0, 1, 1], [], []>} : vector<8x16xf32>, vector<16x64xf32>, vector<8x64xf32> -> vector<8x64xf32>
    %c0_7 = arith.constant 0 : index
    %c0_8 = arith.constant 0 : index
    %5 = vector.load %arg5[%c0_7, %c0_8] : memref<16x64xf32, #tpu.memory_space<vmem>>, vector<16x64xf32>
    %cst_9 = arith.constant dense<0.000000e+00> : vector<8x64xf32>
    %6 = tpu.matmul %1, %5, %cst_9 {dimension_numbers = #tpu.dot_dimension_numbers<[1], [0], [0], [1], [0, 0, 1, 1], [], []>} : vector<8x16xf32>, vector<16x64xf32>, vector<8x64xf32> -> vector<8x64xf32>
    %7 = arith.addf %4, %6 : vector<8x64xf32>
    %c0_10 = arith.constant 0 : index
    %c0_11 = arith.constant 0 : index
    %8 = vector.load %arg6[%c0_10, %c0_11] : memref<1x64xf32, #tpu.memory_space<vmem>>, vector<1x64xf32>
    %9 = vector.broadcast %8 : vector<1x64xf32> to vector<8x64xf32>
    %10 = arith.addf %7, %9 : vector<8x64xf32>
    %cst_12 = arith.constant 0.000000e+00 : f32
    %11 = vector.broadcast %cst_12 : f32 to vector<8x64xf32>
    %12 = arith.maximumf %10, %11 : vector<8x64xf32>
    %c0_13 = arith.constant 0 : index
    %c0_14 = arith.constant 0 : index
    %13 = vector.load %arg7[%c0_13, %c0_14] : memref<64x64xf32, #tpu.memory_space<vmem>>, vector<64x64xf32>
    %cst_15 = arith.constant dense<0.000000e+00> : vector<8x64xf32>
    %14 = tpu.matmul %12, %13, %cst_15 {dimension_numbers = #tpu.dot_dimension_numbers<[1], [0], [0], [1], [0, 0, 1, 1], [], []>} : vector<8x64xf32>, vector<64x64xf32>, vector<8x64xf32> -> vector<8x64xf32>
    %c0_16 = arith.constant 0 : index
    %c0_17 = arith.constant 0 : index
    %15 = vector.load %arg8[%c0_16, %c0_17] : memref<1x64xf32, #tpu.memory_space<vmem>>, vector<1x64xf32>
    %16 = vector.broadcast %15 : vector<1x64xf32> to vector<8x64xf32>
    %17 = arith.addf %14, %16 : vector<8x64xf32>
    %cst_18 = arith.constant 0.000000e+00 : f32
    %18 = vector.broadcast %cst_18 : f32 to vector<8x64xf32>
    %19 = arith.maximumf %17, %18 : vector<8x64xf32>
    %c0_19 = arith.constant 0 : index
    %c0_20 = arith.constant 0 : index
    %20 = vector.load %arg9[%c0_19, %c0_20] : memref<64x64xf32, #tpu.memory_space<vmem>>, vector<64x64xf32>
    %cst_21 = arith.constant dense<0.000000e+00> : vector<8x64xf32>
    %21 = tpu.matmul %19, %20, %cst_21 {dimension_numbers = #tpu.dot_dimension_numbers<[1], [0], [0], [1], [0, 0, 1, 1], [], []>} : vector<8x64xf32>, vector<64x64xf32>, vector<8x64xf32> -> vector<8x64xf32>
    %c0_22 = arith.constant 0 : index
    %c0_23 = arith.constant 0 : index
    %22 = vector.load %arg10[%c0_22, %c0_23] : memref<1x64xf32, #tpu.memory_space<vmem>>, vector<1x64xf32>
    %23 = vector.broadcast %22 : vector<1x64xf32> to vector<8x64xf32>
    %24 = arith.addf %21, %23 : vector<8x64xf32>
    %cst_24 = arith.constant 0.000000e+00 : f32
    %25 = vector.broadcast %cst_24 : f32 to vector<8x64xf32>
    %26 = arith.maximumf %24, %25 : vector<8x64xf32>
    %c0_25 = arith.constant 0 : index
    %c0_26 = arith.constant 0 : index
    %27 = vector.load %arg11[%c0_25, %c0_26] : memref<64x16xf32, #tpu.memory_space<vmem>>, vector<64x16xf32>
    %cst_27 = arith.constant dense<0.000000e+00> : vector<8x16xf32>
    %28 = tpu.matmul %26, %27, %cst_27 {dimension_numbers = #tpu.dot_dimension_numbers<[1], [0], [0], [1], [0, 0, 1, 1], [], []>} : vector<8x64xf32>, vector<64x16xf32>, vector<8x16xf32> -> vector<8x16xf32>
    %c0_28 = arith.constant 0 : index
    %c0_29 = arith.constant 0 : index
    %29 = vector.load %arg12[%c0_28, %c0_29] : memref<1x16xf32, #tpu.memory_space<vmem>>, vector<1x16xf32>
    %30 = vector.broadcast %29 : vector<1x16xf32> to vector<8x16xf32>
    %31 = arith.addf %28, %30 : vector<8x16xf32>
    %cst_30 = arith.constant 1.000000e+00 : f32
    %32 = vector.broadcast %cst_30 : f32 to vector<8x1xf32>
    %33 = arith.subf %32, %2 : vector<8x1xf32>
    %34 = arith.subf %0, %31 : vector<8x16xf32>
    %35 = arith.subf %1, %31 : vector<8x16xf32>
    %36 = arith.mulf %33, %33 : vector<8x1xf32>
    %37 = vector.broadcast %36 : vector<8x1xf32> to vector<8x16xf32>
    %38 = arith.mulf %37, %34 : vector<8x16xf32>
    %39 = arith.addf %31, %38 : vector<8x16xf32>
    %40 = arith.mulf %2, %2 : vector<8x1xf32>
    %41 = vector.broadcast %40 : vector<8x1xf32> to vector<8x16xf32>
    %42 = arith.mulf %41, %35 : vector<8x16xf32>
    %43 = arith.addf %39, %42 : vector<8x16xf32>
    %c0_31 = arith.constant 0 : index
    %c0_32 = arith.constant 0 : index
    %44 = vector.load %arg13[%c0_31, %c0_32] : memref<8x16xf32, #tpu.memory_space<vmem>>, vector<8x16xf32>
    tpu.vector_store %arg13[%c0_31, %c0_32], %43 {strides = array<i32>} : memref<8x16xf32, #tpu.memory_space<vmem>>, vector<8x16xf32>,
    %45 = vector.broadcast %2 : vector<8x1xf32> to vector<8x16xf32>
    %46 = arith.mulf %45, %35 : vector<8x16xf32>
    %47 = vector.broadcast %33 : vector<8x1xf32> to vector<8x16xf32>
    %48 = arith.mulf %47, %34 : vector<8x16xf32>
    %49 = arith.subf %46, %48 : vector<8x16xf32>
    %cst_33 = arith.constant 2.000000e+00 : f32
    %50 = vector.broadcast %cst_33 : f32 to vector<8x16xf32>
    %51 = arith.mulf %50, %49 : vector<8x16xf32>
    %c0_34 = arith.constant 0 : index
    %c0_35 = arith.constant 0 : index
    %52 = vector.load %arg14[%c0_34, %c0_35] : memref<8x16xf32, #tpu.memory_space<vmem>>, vector<8x16xf32>
    tpu.vector_store %arg14[%c0_34, %c0_35], %51 {strides = array<i32>} : memref<8x16xf32, #tpu.memory_space<vmem>>, vector<8x16xf32>,
    return
  }
  func.func @transform_0(%arg0: i32) -> (i32, i32) {
    %c0_i32 = arith.constant 0 : i32
    %c0_i32_0 = arith.constant 0 : i32
    return %arg0, %c0_i32 : i32, i32
  }
  func.func @transform_1(%arg0: i32) -> (i32, i32) {
    %c0_i32 = arith.constant 0 : i32
    %c0_i32_0 = arith.constant 0 : i32
    return %arg0, %c0_i32 : i32, i32
  }
  func.func @transform_2(%arg0: i32) -> (i32, i32) {
    %c0_i32 = arith.constant 0 : i32
    %c0_i32_0 = arith.constant 0 : i32
    return %arg0, %c0_i32 : i32, i32
  }
  func.func @transform_3(%arg0: i32) -> (i32, i32) {
    %c0_i32 = arith.constant 0 : i32
    %c0_i32_0 = arith.constant 0 : i32
    %c0_i32_1 = arith.constant 0 : i32
    return %c0_i32, %c0_i32_0 : i32, i32
  }
  func.func @transform_4(%arg0: i32) -> (i32, i32) {
    %c0_i32 = arith.constant 0 : i32
    %c0_i32_0 = arith.constant 0 : i32
    %c0_i32_1 = arith.constant 0 : i32
    return %c0_i32, %c0_i32_0 : i32, i32
  }
  func.func @transform_5(%arg0: i32) -> (i32, i32) {
    %c0_i32 = arith.constant 0 : i32
    %c0_i32_0 = arith.constant 0 : i32
    %c0_i32_1 = arith.constant 0 : i32
    return %c0_i32, %c0_i32_0 : i32, i32
  }
  func.func @transform_6(%arg0: i32) -> (i32, i32) {
    %c0_i32 = arith.constant 0 : i32
    %c0_i32_0 = arith.constant 0 : i32
    %c0_i32_1 = arith.constant 0 : i32
    return %c0_i32, %c0_i32_0 : i32, i32
  }
  func.func @transform_7(%arg0: i32) -> (i32, i32) {
    %c0_i32 = arith.constant 0 : i32
    %c0_i32_0 = arith.constant 0 : i32
    %c0_i32_1 = arith.constant 0 : i32
    return %c0_i32, %c0_i32_0 : i32, i32
  }
  func.func @transform_8(%arg0: i32) -> (i32, i32) {
    %c0_i32 = arith.constant 0 : i32
    %c0_i32_0 = arith.constant 0 : i32
    %c0_i32_1 = arith.constant 0 : i32
    return %c0_i32, %c0_i32_0 : i32, i32
  }
  func.func @transform_9(%arg0: i32) -> (i32, i32) {
    %c0_i32 = arith.constant 0 : i32
    %c0_i32_0 = arith.constant 0 : i32
    %c0_i32_1 = arith.constant 0 : i32
    return %c0_i32, %c0_i32_0 : i32, i32
  }
  func.func @transform_10(%arg0: i32) -> (i32, i32) {
    %c0_i32 = arith.constant 0 : i32
    %c0_i32_0 = arith.constant 0 : i32
    %c0_i32_1 = arith.constant 0 : i32
    return %c0_i32, %c0_i32_0 : i32, i32
  }
  func.func @transform_11(%arg0: i32) -> (i32, i32) {
    %c0_i32 = arith.constant 0 : i32
    %c0_i32_0 = arith.constant 0 : i32
    %c0_i32_1 = arith.constant 0 : i32
    return %c0_i32, %c0_i32_0 : i32, i32
  }
  func.func @transform_12(%arg0: i32) -> (i32, i32) {
    %c0_i32 = arith.constant 0 : i32
    %c0_i32_0 = arith.constant 0 : i32
    return %arg0, %c0_i32 : i32, i32
  }
  func.func @transform_13(%arg0: i32) -> (i32, i32) {
    %c0_i32 = arith.constant 0 : i32
    %c0_i32_0 = arith.constant 0 : i32
    return %arg0, %c0_i32 : i32, i32
  }
}

</mosaic_0001>

<llo_original>
// kernel: bezier_interpolant2.1
$region0: #{bezier_interpolant2.1}
  #allocation0 [shape = 'u32[]', space=smem, size = 0x4, offset = 0x4, fixed_abs, tag = 'smem constant byte address 0x4 - core index']
  #allocation1 [shape = 'u32[144,128]{1,0:T(1,128)}', space=vmem, size = 0x12000, scoped, tag = 'internal scratch']
  %s0 = inlined_call_operand.vmem [shape: f32[8,16], index: 0, kind: input, shape index: {}]
  %s1 = inlined_call_operand.hbm [shape: f32[8,16], index: 1, kind: input, shape index: {}]
  %s2 = inlined_call_operand.vmem [shape: f32[8,1], index: 2, kind: input, shape index: {}]
  %s3 = inlined_call_operand.vmem [shape: f32[16,64], index: 3, kind: input, shape index: {}]
  %s4 = inlined_call_operand.vmem [shape: f32[16,64], index: 4, kind: input, shape index: {}]
  %s5 = inlined_call_operand.vmem [shape: f32[1,64], index: 5, kind: input, shape index: {}]
  %s6 = inlined_call_operand.vmem [shape: f32[64,64], index: 6, kind: input, shape index: {}]
  %s7 = inlined_call_operand.vmem [shape: f32[1,64], index: 7, kind: input, shape index: {}]
  %s8 = inlined_call_operand.hbm [shape: f32[64,64], index: 8, kind: input, shape index: {}]
  %s9 = inlined_call_operand.vmem [shape: f32[1,64], index: 9, kind: input, shape index: {}]
  %s10 = inlined_call_operand.vmem [shape: f32[64,16], index: 10, kind: input, shape index: {}]
  %s11 = inlined_call_operand.vmem [shape: f32[1,16], index: 11, kind: input, shape index: {}]
  %s12 = inlined_call_operand.hbm [shape: f32[8,16], index: 12, kind: output, shape index: {0}]
  %s13 = inlined_call_operand.hbm [shape: f32[8,16], index: 13, kind: output, shape index: {1}]
  %14 = xla_tuple %s12, %s13
  %s15 = sld [smem:[#allocation0]]
  $region74: #{bezier_interpolant2.1} parent=0
    _
  %s17 = ssub.s32 1, %s15
  %s18 = scalar_select 0, %s17, %s15
  $region1: #{bezier_interpolant2.1} parent=0
    #allocation2 [shape = 'u8[4096]{0}', space=vmem, size = 0x1000, scoped, tag = 'input window, operand 1, single buffered']
    #allocation3 [shape = 's32[1]{0}', space=sflag, size = 0x4, scoped, tag = 'scoped memory for bezier_interpolant2.1']
    #allocation4 [shape = 's32[1]{0}', space=sflag, size = 0x4, scoped, tag = 'scoped memory for bezier_interpolant2.1']
    #allocation5 [shape = 'u8[32768]{0}', space=vmem, size = 0x8000, scoped, tag = 'input window, operand 8, single buffered']
    #allocation6 [shape = 's32[1]{0}', space=sflag, size = 0x4, scoped, tag = 'scoped memory for bezier_interpolant2.1']
    #allocation7 [shape = 'u8[4096]{0}', space=vmem, size = 0x1000, scoped, tag = 'output window, operand 0, single buffered']
    #allocation8 [shape = 'u8[4096]{0}', space=vmem, size = 0x1000, scoped, tag = 'output window, operand 1, single buffered']
    #allocation9 [shape = 's32[1]{0}', space=sflag, size = 0x4, scoped, tag = 'scoped memory for bezier_interpolant2.1']
    %19 = vsyncpa [#allocation3], 0
    %20 = vsyncpa [#allocation6], 0
    %21 = vsyncpa [#allocation4], 0
    %22 = vsyncpa [#allocation9], 0
    // Predicated region
    $region2: #{bezier_interpolant2.1} parent=1 // pred_check
      _
    $region3: #{bezier_interpolant2.1} parent=1 // pred_check_branch
      %24 = sbr.rel (0) target = $region5
    $region4: #{bezier_interpolant2.1} parent=1 // pred_region
      _
    $region5: #{bezier_interpolant2.1} parent=1 // pred_fallthru
      _
    // Predicated region
    $region6: #{bezier_interpolant2.1} parent=1 // pred_check
      _
    $region7: #{bezier_interpolant2.1} parent=1 // pred_check_branch
      %26 = sbr.rel (0) target = $region9
    $region8: #{bezier_interpolant2.1} parent=1 // pred_region
      %s28 = ssub.s32 128, 128
      %29 = vsyncadd [#allocation3], %s28
      %s31 = sshll.u32 [#allocation2], 4
      %s32 = int_to_ptr.vmem [resolvable:$true] %s31
      %34 = dma.hbm_to_vmem [thread:$0]  %s1, 128, %s32, [#allocation3]
    $region9: #{bezier_interpolant2.1} parent=1 // pred_fallthru
      _
    // Predicated region
    $region10: #{bezier_interpolant2.1} parent=1 // pred_check
      _
    $region11: #{bezier_interpolant2.1} parent=1 // pred_check_branch
      %36 = sbr.rel (0) target = $region13
    $region12: #{bezier_interpolant2.1} parent=1 // pred_region
      _
    $region13: #{bezier_interpolant2.1} parent=1 // pred_fallthru
      _
    // Predicated region
    $region14: #{bezier_interpolant2.1} parent=1 // pred_check
      _
    $region15: #{bezier_interpolant2.1} parent=1 // pred_check_branch
      %38 = sbr.rel (0) target = $region17
    $region16: #{bezier_interpolant2.1} parent=1 // pred_region
      _
    $region17: #{bezier_interpolant2.1} parent=1 // pred_fallthru
      _
    // Predicated region
    $region18: #{bezier_interpolant2.1} parent=1 // pred_check
      _
    $region19: #{bezier_interpolant2.1} parent=1 // pred_check_branch
      %40 = sbr.rel (0) target = $region21
    $region20: #{bezier_interpolant2.1} parent=1 // pred_region
      _
    $region21: #{bezier_interpolant2.1} parent=1 // pred_fallthru
      _
    // Predicated region
    $region22: #{bezier_interpolant2.1} parent=1 // pred_check
      _
    $region23: #{bezier_interpolant2.1} parent=1 // pred_check_branch
      %42 = sbr.rel (0) target = $region25
    $region24: #{bezier_interpolant2.1} parent=1 // pred_region
      _
    $region25: #{bezier_interpolant2.1} parent=1 // pred_fallthru
      _
    // Predicated region
    $region26: #{bezier_interpolant2.1} parent=1 // pred_check
      _
    $region27: #{bezier_interpolant2.1} parent=1 // pred_check_branch
      %44 = sbr.rel (0) target = $region29
    $region28: #{bezier_interpolant2.1} parent=1 // pred_region
      _
    $region29: #{bezier_interpolant2.1} parent=1 // pred_fallthru
      _
    // Predicated region
    $region30: #{bezier_interpolant2.1} parent=1 // pred_check
      _
    $region31: #{bezier_interpolant2.1} parent=1 // pred_check_branch
      %46 = sbr.rel (0) target = $region33
    $region32: #{bezier_interpolant2.1} parent=1 // pred_region
      _
    $region33: #{bezier_interpolant2.1} parent=1 // pred_fallthru
      _
    // Predicated region
    $region34: #{bezier_interpolant2.1} parent=1 // pred_check
      _
    $region35: #{bezier_interpolant2.1} parent=1 // pred_check_branch
      %48 = sbr.rel (0) target = $region37
    $region36: #{bezier_interpolant2.1} parent=1 // pred_region
      %s50 = ssub.s32 1024, 1024
      %51 = vsyncadd [#allocation6], %s50
      %s52 = sshll.u32 [#allocation5], 4
      %s53 = int_to_ptr.vmem [resolvable:$true] %s52
      %58 = dma.hbm_to_vmem [thread:$0]  %s8, 1024, %s53, [#allocation6], 128, 128, 8
    $region37: #{bezier_interpolant2.1} parent=1 // pred_fallthru
      _
    // Predicated region
    $region38: #{bezier_interpolant2.1} parent=1 // pred_check
      _
    $region39: #{bezier_interpolant2.1} parent=1 // pred_check_branch
      %60 = sbr.rel (0) target = $region41
    $region40: #{bezier_interpolant2.1} parent=1 // pred_region
      _
    $region41: #{bezier_interpolant2.1} parent=1 // pred_fallthru
      _
    // Predicated region
    $region42: #{bezier_interpolant2.1} parent=1 // pred_check
      _
    $region43: #{bezier_interpolant2.1} parent=1 // pred_check_branch
      %62 = sbr.rel (0) target = $region45
    $region44: #{bezier_interpolant2.1} parent=1 // pred_region
      _
    $region45: #{bezier_interpolant2.1} parent=1 // pred_fallthru
      _
    // Predicated region
    $region46: #{bezier_interpolant2.1} parent=1 // pred_check
      _
    $region47: #{bezier_interpolant2.1} parent=1 // pred_check_branch
      %64 = sbr.rel (0) target = $region49
    $region48: #{bezier_interpolant2.1} parent=1 // pred_region
      _
    $region49: #{bezier_interpolant2.1} parent=1 // pred_fallthru
      _
    // Predicated region
    $region50: #{bezier_interpolant2.1} parent=1 // pred_check
      _
    $region51: #{bezier_interpolant2.1} parent=1 // pred_check_branch
      %66 = sbr.rel (0) target = $region53
    $region52: #{bezier_interpolant2.1} parent=1 // pred_region
      %67 = dma.done [#allocation3], 128
    $region53: #{bezier_interpolant2.1} parent=1 // pred_fallthru
      _
    // Predicated region
    $region54: #{bezier_interpolant2.1} parent=1 // pred_check
      _
    $region55: #{bezier_interpolant2.1} parent=1 // pred_check_branch
      %69 = sbr.rel (0) target = $region57
    $region56: #{bezier_interpolant2.1} parent=1 // pred_region
      %70 = dma.done [#allocation6], 1024
    $region57: #{bezier_interpolant2.1} parent=1 // pred_fallthru
      _
    %v71 = vld [vmem:[%s0] sm:$0xff]
    %v72 = vld [vmem:[#allocation2] sm:$0xff]
    %v73 = vld [vmem:[%s2] sm:$0xff]
    %v74 = vld [vmem:[%s3] sm:$0xff]
    %v75 = vld [vmem:[%s3 + $0x8] sm:$0xff]
    %v76 = vld [vmem:[%s4] sm:$0xff]
    %v77 = vld [vmem:[%s4 + $0x8] sm:$0xff]
    %vm78 = vcmask 130048
    %v80 = vsel %vm78, %v72, 0
    %82 = vmatprep.subr.mxu0 0.0
    %83 = vmatpush1.msra.mxu0 %v76
    %84 = vmatprep.subr.mxu0 0.0
    %85 = vmatpush1.msra.mxu0 %v77
    %86 = vmatprep.subr.mxu0 0.0
    %87 = vmatpush1.msra.mxu0 0.0
    %88 = vmatprep.subr.mxu0 0.0
    %89 = vmatpush1.msra.mxu0 0.0
    %90 = vmatprep.subr.mxu0 0.0
    %91 = vmatpush1.msra.mxu0 0.0
    %92 = vmatprep.subr.mxu0 0.0
    %93 = vmatpush1.msra.mxu0 0.0
    %94 = vmatprep.subr.mxu0 0.0
    %95 = vmatpush1.msra.mxu0 0.0
    %96 = vmatprep.subr.mxu0 0.0
    %97 = vmatpush1.msra.mxu0 0.0
    %98 = vmatprep.subr.mxu0 0.0
    %99 = vmatpush1.msra.mxu0 0.0
    %100 = vmatprep.subr.mxu0 0.0
    %101 = vmatpush1.msra.mxu0 0.0
    %102 = vmatprep.subr.mxu0 0.0
    %103 = vmatpush1.msra.mxu0 0.0
    %104 = vmatprep.subr.mxu0 0.0
    %105 = vmatpush1.msra.mxu0 0.0
    %106 = vmatprep.subr.mxu0 0.0
    %107 = vmatpush1.msra.mxu0 0.0
    %108 = vmatprep.subr.mxu0 0.0
    %109 = vmatpush1.msra.mxu0 0.0
    %110 = vmatprep.subr.mxu0 0.0
    %111 = vmatpush1.msra.mxu0 0.0
    %112 = vmatprep.subr.mxu0 0.0
    %113 = vmatpush1.msra.mxu0 0.0
    %114 = vmatprep.subr.mxu0 0.0
    %115 = vmatpush1.msra.mxu0 0.0
    %116 = vmatprep.subr.mxu0 0.0
    %117 = vmatpush1.msra.mxu0 0.0
    %118 = vmatprep.subr.mxu0 0.0
    %119 = vmatpush1.msra.mxu0 0.0
    %120 = vmatprep.subr.mxu0 0.0
    %121 = vmatpush1.msra.mxu0 0.0
    %122 = vmatprep.subr.mxu0 0.0
    %123 = vmatpush1.msra.mxu0 0.0
    %124 = vmatprep.subr.mxu0 0.0
    %125 = vmatpush1.msra.mxu0 0.0
    %126 = vmatprep.subr.mxu0 0.0
    %127 = vmatpush1.msra.mxu0 0.0
    %128 = vmatprep.subr.mxu0 0.0
    %129 = vmatpush1.msra.mxu0 0.0
    %130 = vmatprep.subr.mxu0 0.0
    %131 = vmatpush1.msra.mxu0 0.0
    %132 = vmatprep.subr.mxu0 0.0
    %133 = vmatpush1.msra.mxu0 0.0
    %134 = vmatprep.subr.mxu0 0.0
    %135 = vmatpush1.msra.mxu0 0.0
    %136 = vmatprep.subr.mxu0 0.0
    %137 = vmatpush1.msra.mxu0 0.0
    %138 = vmatprep.subr.mxu0 0.0
    %139 = vmatpush1.msra.mxu0 0.0
    %140 = vmatprep.subr.mxu0 0.0
    %141 = vmatpush1.msra.mxu0 0.0
    %142 = vmatprep.subr.mxu0 0.0
    %143 = vmatpush1.msra.mxu0 0.0
    %144 = vmatprep.subr.mxu0 0.0
    %145 = vmatpush1.msra.mxu0 0.0
    %146 = vmatprep.mubr.f32.mxu0 0.0
    %147 = vmatmul.mubr.f32.gmra.mrb[0].mxu0 %v80
    %v148 = vpop.f32.mrb[0].mxu0
    %v149 = vadd.f32 0.0, %v148
    %v150 = vpop.f32.mrb[0].mxu0
    %151 = vdwg.mxu0
    %v153 = vsel %vm78, %v71, 0
    %155 = vmatprep.subr.mxu0 0.0
    %156 = vmatpush1.msra.mxu0 %v74
    %157 = vmatprep.subr.mxu0 0.0
    %158 = vmatpush1.msra.mxu0 %v75
    %159 = vmatprep.subr.mxu0 0.0
    %160 = vmatpush1.msra.mxu0 0.0
    %161 = vmatprep.subr.mxu0 0.0
    %162 = vmatpush1.msra.mxu0 0.0
    %163 = vmatprep.subr.mxu0 0.0
    %164 = vmatpush1.msra.mxu0 0.0
    %165 = vmatprep.subr.mxu0 0.0
    %166 = vmatpush1.msra.mxu0 0.0
    %167 = vmatprep.subr.mxu0 0.0
    %168 = vmatpush1.msra.mxu0 0.0
    %169 = vmatprep.subr.mxu0 0.0
    %170 = vmatpush1.msra.mxu0 0.0
    %171 = vmatprep.subr.mxu0 0.0
    %172 = vmatpush1.msra.mxu0 0.0
    %173 = vmatprep.subr.mxu0 0.0
    %174 = vmatpush1.msra.mxu0 0.0
    %175 = vmatprep.subr.mxu0 0.0
    %176 = vmatpush1.msra.mxu0 0.0
    %177 = vmatprep.subr.mxu0 0.0
    %178 = vmatpush1.msra.mxu0 0.0
    %179 = vmatprep.subr.mxu0 0.0
    %180 = vmatpush1.msra.mxu0 0.0
    %181 = vmatprep.subr.mxu0 0.0
    %182 = vmatpush1.msra.mxu0 0.0
    %183 = vmatprep.subr.mxu0 0.0
    %184 = vmatpush1.msra.mxu0 0.0
    %185 = vmatprep.subr.mxu0 0.0
    %186 = vmatpush1.msra.mxu0 0.0
    %187 = vmatprep.subr.mxu0 0.0
    %188 = vmatpush1.msra.mxu0 0.0
    %189 = vmatprep.subr.mxu0 0.0
    %190 = vmatpush1.msra.mxu0 0.0
    %191 = vmatprep.subr.mxu0 0.0
    %192 = vmatpush1.msra.mxu0 0.0
    %193 = vmatprep.subr.mxu0 0.0
    %194 = vmatpush1.msra.mxu0 0.0
    %195 = vmatprep.subr.mxu0 0.0
    %196 = vmatpush1.msra.mxu0 0.0
    %197 = vmatprep.subr.mxu0 0.0
    %198 = vmatpush1.msra.mxu0 0.0
    %199 = vmatprep.subr.mxu0 0.0
    %200 = vmatpush1.msra.mxu0 0.0
    %201 = vmatprep.subr.mxu0 0.0
    %202 = vmatpush1.msra.mxu0 0.0
    %203 = vmatprep.subr.mxu0 0.0
    %204 = vmatpush1.msra.mxu0 0.0
    %205 = vmatprep.subr.mxu0 0.0
    %206 = vmatpush1.msra.mxu0 0.0
    %207 = vmatprep.subr.mxu0 0.0
    %208 = vmatpush1.msra.mxu0 0.0
    %209 = vmatprep.subr.mxu0 0.0
    %210 = vmatpush1.msra.mxu0 0.0
    %211 = vmatprep.subr.mxu0 0.0
    %212 = vmatpush1.msra.mxu0 0.0
    %213 = vmatprep.subr.mxu0 0.0
    %214 = vmatpush1.msra.mxu0 0.0
    %215 = vmatprep.subr.mxu0 0.0
    %216 = vmatpush1.msra.mxu0 0.0
    %217 = vmatprep.subr.mxu0 0.0
    %218 = vmatpush1.msra.mxu0 0.0
    %219 = vmatprep.mubr.f32.mxu0 0.0
    %220 = vmatmul.mubr.f32.gmra.mrb[0].mxu0 %v153
    %v221 = vpop.f32.mrb[0].mxu0
    %v222 = vadd.f32 %v149, %v221
    %v223 = vpop.f32.mrb[0].mxu0
    %224 = vdwg.mxu0
    %v225 = vld [vmem:[%s5] sm:$0x1]
    %v227 = vlaneseq
    %v228 = vshrl.u32 %v227, 7
    %v229 = vsub.s32 0, %v228
    %v230 = vrot.slane %v225, %v229
    %v232 = vadd.f32 %v222, %v230
    %v233 = vmax.f32 %v232, 0.0
    %v234 = vld [vmem:[%s6] sm:$0xff]
    %v235 = vld [vmem:[%s6 + $0x8] sm:$0xff]
    %v236 = vld [vmem:[%s6 + $0x10] sm:$0xff]
    %v237 = vld [vmem:[%s6 + $0x18] sm:$0xff]
    %v238 = vld [vmem:[%s6 + $0x20] sm:$0xff]
    %v239 = vld [vmem:[%s6 + $0x28] sm:$0xff]
    %v240 = vld [vmem:[%s6 + $0x30] sm:$0xff]
    %v241 = vld [vmem:[%s6 + $0x38] sm:$0xff]
    %v242 = vld [vmem:[%s7] sm:$0x1]
    %v244 = vlaneseq
    %v245 = vshrl.u32 %v244, 7
    %v246 = vsub.s32 0, %v245
    %v247 = vrot.slane %v242, %v246
    %vm249 = vcmask 523264
    %v251 = vsel %vm249, %v233, 0
    %253 = vmatprep.subr.mxu0 0.0
    %254 = vmatpush1.msra.mxu0 %v234
    %255 = vmatprep.subr.mxu0 0.0
    %256 = vmatpush1.msra.mxu0 %v235
    %257 = vmatprep.subr.mxu0 0.0
    %258 = vmatpush1.msra.mxu0 %v236
    %259 = vmatprep.subr.mxu0 0.0
    %260 = vmatpush1.msra.mxu0 %v237
    %261 = vmatprep.subr.mxu0 0.0
    %262 = vmatpush1.msra.mxu0 %v238
    %263 = vmatprep.subr.mxu0 0.0
    %264 = vmatpush1.msra.mxu0 %v239
    %265 = vmatprep.subr.mxu0 0.0
    %266 = vmatpush1.msra.mxu0 %v240
    %267 = vmatprep.subr.mxu0 0.0
    %268 = vmatpush1.msra.mxu0 %v241
    %269 = vmatprep.subr.mxu0 0.0
    %270 = vmatpush1.msra.mxu0 0.0
    %271 = vmatprep.subr.mxu0 0.0
    %272 = vmatpush1.msra.mxu0 0.0
    %273 = vmatprep.subr.mxu0 0.0
    %274 = vmatpush1.msra.mxu0 0.0
    %275 = vmatprep.subr.mxu0 0.0
    %276 = vmatpush1.msra.mxu0 0.0
    %277 = vmatprep.subr.mxu0 0.0
    %278 = vmatpush1.msra.mxu0 0.0
    %279 = vmatprep.subr.mxu0 0.0
    %280 = vmatpush1.msra.mxu0 0.0
    %281 = vmatprep.subr.mxu0 0.0
    %282 = vmatpush1.msra.mxu0 0.0
    %283 = vmatprep.subr.mxu0 0.0
    %284 = vmatpush1.msra.mxu0 0.0
    %285 = vmatprep.subr.mxu0 0.0
    %286 = vmatpush1.msra.mxu0 0.0
    %287 = vmatprep.subr.mxu0 0.0
    %288 = vmatpush1.msra.mxu0 0.0
    %289 = vmatprep.subr.mxu0 0.0
    %290 = vmatpush1.msra.mxu0 0.0
    %291 = vmatprep.subr.mxu0 0.0
    %292 = vmatpush1.msra.mxu0 0.0
    %293 = vmatprep.subr.mxu0 0.0
    %294 = vmatpush1.msra.mxu0 0.0
    %295 = vmatprep.subr.mxu0 0.0
    %296 = vmatpush1.msra.mxu0 0.0
    %297 = vmatprep.subr.mxu0 0.0
    %298 = vmatpush1.msra.mxu0 0.0
    %299 = vmatprep.subr.mxu0 0.0
    %300 = vmatpush1.msra.mxu0 0.0
    %301 = vmatprep.subr.mxu0 0.0
    %302 = vmatpush1.msra.mxu0 0.0
    %303 = vmatprep.subr.mxu0 0.0
    %304 = vmatpush1.msra.mxu0 0.0
    %305 = vmatprep.subr.mxu0 0.0
    %306 = vmatpush1.msra.mxu0 0.0
    %307 = vmatprep.subr.mxu0 0.0
    %308 = vmatpush1.msra.mxu0 0.0
    %309 = vmatprep.subr.mxu0 0.0
    %310 = vmatpush1.msra.mxu0 0.0
    %311 = vmatprep.subr.mxu0 0.0
    %312 = vmatpush1.msra.mxu0 0.0
    %313 = vmatprep.subr.mxu0 0.0
    %314 = vmatpush1.msra.mxu0 0.0
    %315 = vmatprep.subr.mxu0 0.0
    %316 = vmatpush1.msra.mxu0 0.0
    %317 = vmatprep.mubr.f32.mxu0 0.0
    %318 = vmatmul.mubr.f32.gmra.mrb[0].mxu0 %v251
    %v319 = vpop.f32.mrb[0].mxu0
    %v320 = vadd.f32 %v247, %v319
    %v321 = vpop.f32.mrb[0].mxu0
    %322 = vdwg.mxu0
    %v323 = vmax.f32 %v320, 0.0
    %v324 = vld [vmem:[#allocation5] sm:$0xff]
    %v325 = vld [vmem:[#allocation5 + $0x8] sm:$0xff]
    %v326 = vld [vmem:[#allocation5 + $0x10] sm:$0xff]
    %v327 = vld [vmem:[#allocation5 + $0x18] sm:$0xff]
    %v328 = vld [vmem:[#allocation5 + $0x20] sm:$0xff]
    %v329 = vld [vmem:[#allocation5 + $0x28] sm:$0xff]
    %v330 = vld [vmem:[#allocation5 + $0x30] sm:$0xff]
    %v331 = vld [vmem:[#allocation5 + $0x38] sm:$0xff]
    %v332 = vld [vmem:[%s9] sm:$0x1]
    %v334 = vlaneseq
    %v335 = vshrl.u32 %v334, 7
    %v336 = vsub.s32 0, %v335
    %v337 = vrot.slane %v332, %v336
    %v340 = vsel %vm249, %v323, 0
    %342 = vmatprep.subr.mxu0 0.0
    %343 = vmatpush1.msra.mxu0 %v324
    %344 = vmatprep.subr.mxu0 0.0
    %345 = vmatpush1.msra.mxu0 %v325
    %346 = vmatprep.subr.mxu0 0.0
    %347 = vmatpush1.msra.mxu0 %v326
    %348 = vmatprep.subr.mxu0 0.0
    %349 = vmatpush1.msra.mxu0 %v327
    %350 = vmatprep.subr.mxu0 0.0
    %351 = vmatpush1.msra.mxu0 %v328
    %352 = vmatprep.subr.mxu0 0.0
    %353 = vmatpush1.msra.mxu0 %v329
    %354 = vmatprep.subr.mxu0 0.0
    %355 = vmatpush1.msra.mxu0 %v330
    %356 = vmatprep.subr.mxu0 0.0
    %357 = vmatpush1.msra.mxu0 %v331
    %358 = vmatprep.subr.mxu0 0.0
    %359 = vmatpush1.msra.mxu0 0.0
    %360 = vmatprep.subr.mxu0 0.0
    %361 = vmatpush1.msra.mxu0 0.0
    %362 = vmatprep.subr.mxu0 0.0
    %363 = vmatpush1.msra.mxu0 0.0
    %364 = vmatprep.subr.mxu0 0.0
    %365 = vmatpush1.msra.mxu0 0.0
    %366 = vmatprep.subr.mxu0 0.0
    %367 = vmatpush1.msra.mxu0 0.0
    %368 = vmatprep.subr.mxu0 0.0
    %369 = vmatpush1.msra.mxu0 0.0
    %370 = vmatprep.subr.mxu0 0.0
    %371 = vmatpush1.msra.mxu0 0.0
    %372 = vmatprep.subr.mxu0 0.0
    %373 = vmatpush1.msra.mxu0 0.0
    %374 = vmatprep.subr.mxu0 0.0
    %375 = vmatpush1.msra.mxu0 0.0
    %376 = vmatprep.subr.mxu0 0.0
    %377 = vmatpush1.msra.mxu0 0.0
    %378 = vmatprep.subr.mxu0 0.0
    %379 = vmatpush1.msra.mxu0 0.0
    %380 = vmatprep.subr.mxu0 0.0
    %381 = vmatpush1.msra.mxu0 0.0
    %382 = vmatprep.subr.mxu0 0.0
    %383 = vmatpush1.msra.mxu0 0.0
    %384 = vmatprep.subr.mxu0 0.0
    %385 = vmatpush1.msra.mxu0 0.0
    %386 = vmatprep.subr.mxu0 0.0
    %387 = vmatpush1.msra.mxu0 0.0
    %388 = vmatprep.subr.mxu0 0.0
    %389 = vmatpush1.msra.mxu0 0.0
    %390 = vmatprep.subr.mxu0 0.0
    %391 = vmatpush1.msra.mxu0 0.0
    %392 = vmatprep.subr.mxu0 0.0
    %393 = vmatpush1.msra.mxu0 0.0
    %394 = vmatprep.subr.mxu0 0.0
    %395 = vmatpush1.msra.mxu0 0.0
    %396 = vmatprep.subr.mxu0 0.0
    %397 = vmatpush1.msra.mxu0 0.0
    %398 = vmatprep.subr.mxu0 0.0
    %399 = vmatpush1.msra.mxu0 0.0
    %400 = vmatprep.subr.mxu0 0.0
    %401 = vmatpush1.msra.mxu0 0.0
    %402 = vmatprep.subr.mxu0 0.0
    %403 = vmatpush1.msra.mxu0 0.0
    %404 = vmatprep.subr.mxu0 0.0
    %405 = vmatpush1.msra.mxu0 0.0
    %406 = vmatprep.mubr.f32.mxu0 0.0
    %407 = vmatmul.mubr.f32.gmra.mrb[0].mxu0 %v340
    %v408 = vpop.f32.mrb[0].mxu0
    %v409 = vadd.f32 %v337, %v408
    %v410 = vpop.f32.mrb[0].mxu0
    %411 = vdwg.mxu0
    %v412 = vmax.f32 %v409, 0.0
    %v413 = vld [vmem:[%s10] sm:$0xff]
    %v414 = vld [vmem:[%s10 + $0x8] sm:$0xff]
    %v415 = vld [vmem:[%s10 + $0x10] sm:$0xff]
    %v416 = vld [vmem:[%s10 + $0x18] sm:$0xff]
    %v417 = vld [vmem:[%s10 + $0x20] sm:$0xff]
    %v418 = vld [vmem:[%s10 + $0x28] sm:$0xff]
    %v419 = vld [vmem:[%s10 + $0x30] sm:$0xff]
    %v420 = vld [vmem:[%s10 + $0x38] sm:$0xff]
    %v421 = vld [vmem:[%s11] sm:$0x1]
    %v423 = vlaneseq
    %v424 = vshrl.u32 %v423, 7
    %v425 = vsub.s32 0, %v424
    %v426 = vrot.slane %v421, %v425
    %v429 = vsel %vm249, %v412, 0
    %431 = vmatprep.subr.mxu0 0.0
    %432 = vmatpush1.msra.mxu0 %v413
    %433 = vmatprep.subr.mxu0 0.0
    %434 = vmatpush1.msra.mxu0 %v414
    %435 = vmatprep.subr.mxu0 0.0
    %436 = vmatpush1.msra.mxu0 %v415
    %437 = vmatprep.subr.mxu0 0.0
    %438 = vmatpush1.msra.mxu0 %v416
    %439 = vmatprep.subr.mxu0 0.0
    %440 = vmatpush1.msra.mxu0 %v417
    %441 = vmatprep.subr.mxu0 0.0
    %442 = vmatpush1.msra.mxu0 %v418
    %443 = vmatprep.subr.mxu0 0.0
    %444 = vmatpush1.msra.mxu0 %v419
    %445 = vmatprep.subr.mxu0 0.0
    %446 = vmatpush1.msra.mxu0 %v420
    %447 = vmatprep.subr.mxu0 0.0
    %448 = vmatpush1.msra.mxu0 0.0
    %449 = vmatprep.subr.mxu0 0.0
    %450 = vmatpush1.msra.mxu0 0.0
    %451 = vmatprep.subr.mxu0 0.0
    %452 = vmatpush1.msra.mxu0 0.0
    %453 = vmatprep.subr.mxu0 0.0
    %454 = vmatpush1.msra.mxu0 0.0
    %455 = vmatprep.subr.mxu0 0.0
    %456 = vmatpush1.msra.mxu0 0.0
    %457 = vmatprep.subr.mxu0 0.0
    %458 = vmatpush1.msra.mxu0 0.0
    %459 = vmatprep.subr.mxu0 0.0
    %460 = vmatpush1.msra.mxu0 0.0
    %461 = vmatprep.subr.mxu0 0.0
    %462 = vmatpush1.msra.mxu0 0.0
    %463 = vmatprep.subr.mxu0 0.0
    %464 = vmatpush1.msra.mxu0 0.0
    %465 = vmatprep.subr.mxu0 0.0
    %466 = vmatpush1.msra.mxu0 0.0
    %467 = vmatprep.subr.mxu0 0.0
    %468 = vmatpush1.msra.mxu0 0.0
    %469 = vmatprep.subr.mxu0 0.0
    %470 = vmatpush1.msra.mxu0 0.0
    %471 = vmatprep.subr.mxu0 0.0
    %472 = vmatpush1.msra.mxu0 0.0
    %473 = vmatprep.subr.mxu0 0.0
    %474 = vmatpush1.msra.mxu0 0.0
    %475 = vmatprep.subr.mxu0 0.0
    %476 = vmatpush1.msra.mxu0 0.0
    %477 = vmatprep.subr.mxu0 0.0
    %478 = vmatpush1.msra.mxu0 0.0
    %479 = vmatprep.subr.mxu0 0.0
    %480 = vmatpush1.msra.mxu0 0.0
    %481 = vmatprep.subr.mxu0 0.0
    %482 = vmatpush1.msra.mxu0 0.0
    %483 = vmatprep.subr.mxu0 0.0
    %484 = vmatpush1.msra.mxu0 0.0
    %485 = vmatprep.subr.mxu0 0.0
    %486 = vmatpush1.msra.mxu0 0.0
    %487 = vmatprep.subr.mxu0 0.0
    %488 = vmatpush1.msra.mxu0 0.0
    %489 = vmatprep.subr.mxu0 0.0
    %490 = vmatpush1.msra.mxu0 0.0
    %491 = vmatprep.subr.mxu0 0.0
    %492 = vmatpush1.msra.mxu0 0.0
    %493 = vmatprep.subr.mxu0 0.0
    %494 = vmatpush1.msra.mxu0 0.0
    %495 = vmatprep.mubr.f32.mxu0 0.0
    %496 = vmatmul.mubr.f32.gmra.mrb[0].mxu0 %v429
    %v497 = vpop.f32.mrb[0].mxu0
    %v498 = vadd.f32 %v426, %v497
    %v499 = vpop.f32.mrb[0].mxu0
    %500 = vdwg.mxu0
    %v501 = vsub.f32 1.0, %v73
    %v502 = vsub.f32 %v71, %v498
    %v503 = vsub.f32 %v72, %v498
    %v504 = vmul.f32 %v501, %v501
    %506 = vset.pattern.permute.xlu0 0
    %507 = vperm.xlu0 %506, %v504
    %v508 = vpop.permute.xlu0 %507
    %v510 = vmul.f32 %v508, %v502
    %v511 = vadd.f32 %v498, %v510
    %v512 = vmul.f32 %v73, %v73
    %514 = vset.pattern.permute.xlu0 0
    %515 = vperm.xlu0 %514, %v512
    %v516 = vpop.permute.xlu0 %515
    %v518 = vmul.f32 %v516, %v503
    %v519 = vadd.f32 %v511, %v518
    %520 = vst.msk [vmem:[#allocation7] sm:$0xff] %vm78, %v519
    %522 = vset.pattern.permute.xlu0 0
    %523 = vperm.xlu0 %522, %v73
    %v524 = vpop.permute.xlu0 %523
    %v526 = vmul.f32 %v524, %v503
    %528 = vset.pattern.permute.xlu0 0
    %529 = vperm.xlu0 %528, %v501
    %v530 = vpop.permute.xlu0 %529
    %v532 = vmul.f32 %v530, %v502
    %v533 = vsub.f32 %v526, %v532
    %v534 = vmul.f32 %v533, 2.0
    %535 = vst.msk [vmem:[#allocation8] sm:$0xff] %vm78, %v534
    // Predicated region
    $region58: #{bezier_interpolant2.1} parent=1 // pred_check
      _
    $region59: #{bezier_interpolant2.1} parent=1 // pred_check_branch
      %537 = sbr.rel (0) target = $region61
    $region60: #{bezier_interpolant2.1} parent=1 // pred_region
      %s539 = ssub.s32 128, 128
      %540 = vsyncadd [#allocation4], %s539
      %s542 = sshll.u32 [#allocation7], 4
      %s543 = int_to_ptr.vmem [resolvable:$true] %s542
      %545 = dma.vmem_to_hbm [thread:$0]  %s543, 128, %s12, [#allocation4]
    $region61: #{bezier_interpolant2.1} parent=1 // pred_fallthru
      _
    // Predicated region
    $region62: #{bezier_interpolant2.1} parent=1 // pred_check
      _
    $region63: #{bezier_interpolant2.1} parent=1 // pred_check_branch
      %547 = sbr.rel (0) target = $region65
    $region64: #{bezier_interpolant2.1} parent=1 // pred_region
      %s549 = ssub.s32 128, 128
      %550 = vsyncadd [#allocation9], %s549
      %s552 = sshll.u32 [#allocation8], 4
      %s553 = int_to_ptr.vmem [resolvable:$true] %s552
      %555 = dma.vmem_to_hbm [thread:$0]  %s553, 128, %s13, [#allocation9]
    $region65: #{bezier_interpolant2.1} parent=1 // pred_fallthru
      _
    // Predicated region
    $region66: #{bezier_interpolant2.1} parent=1 // pred_check
      _
    $region67: #{bezier_interpolant2.1} parent=1 // pred_check_branch
      %557 = sbr.rel (0) target = $region69
    $region68: #{bezier_interpolant2.1} parent=1 // pred_region
      %558 = dma.done [#allocation4], 128
    $region69: #{bezier_interpolant2.1} parent=1 // pred_fallthru
      _
    // Predicated region
    $region70: #{bezier_interpolant2.1} parent=1 // pred_check
      _
    $region71: #{bezier_interpolant2.1} parent=1 // pred_check_branch
      %560 = sbr.rel (0) target = $region73
    $region72: #{bezier_interpolant2.1} parent=1 // pred_region
      %561 = dma.done [#allocation9], 128
    $region73: #{bezier_interpolant2.1} parent=1 // pred_fallthru
      _
    %562 = vsyncpa [#allocation3], 1
    %563 = vsyncpa [#allocation6], 1
    %564 = vsyncpa [#allocation4], 1
    %565 = vsyncpa [#allocation9], 1

</llo_original>
